<compile_context>
chip_gen: v7x
topology: tpu7x:2x2x1
jax: 0.10.0
libtpu: 0.0.40
codegen_flags: <defaults>
</compile_context>

<pallas_src>
import math
from functools import partial

import numpy as np
import jax
import jax.numpy as jnp
from jax.experimental import pallas as pl
from jax.experimental.pallas import tpu as pltpu


# ---------------------------------------------------------------------------
# Host-side tiling helpers
# ---------------------------------------------------------------------------
def _choose_rows(BD, row_target=128):
    """Row-block size R dividing B*D, multiple of 8, preferring >=2 blocks."""
    cands = [r for r in range(8, BD + 1, 8) if BD % r == 0]
    if not cands:
        return BD                       # block == full row dim is always legal
    small = [r for r in cands if r <= row_target]
    if not small:
        return min(cands)
    multi = [r for r in small if BD // r >= 2]   # keep >=2 blocks for megacore
    return max(multi) if multi else max(small)


def _choose_time_tile(L, upp, target_t=2048, max_tile_t=8192):
    """(Lt frames, Tt = Lt*upp samples) per time tile.

    Tt is a multiple of lcm(128, upp): lane-aligned and frame-boundary aligned.
    The caller pads L up to a multiple of Lt (zero f0 frames)."""
    T = L * upp
    base = 128 * upp // math.gcd(128, upp)
    if base > max_tile_t:
        # TODO(synk): upp shares no useful factor with 128; fall back to one
        # full-length tile (may be VMEM-heavy for very long signals).
        return L, T
    n = max(1, min(target_t // base, pl.cdiv(T, base)))
    return (n * base) // upp, n * base


# ---------------------------------------------------------------------------
# Portable in-kernel PRNG (no pltpu.prng_* -> also lowers on CPU/interpret)
# ---------------------------------------------------------------------------
_IH4_MEAN = 4 * 255.0 / 2.0                                   # 510
_IH4_INV_STD = 1.0 / math.sqrt(4.0 * (256.0 ** 2 - 1.0) / 12.0)


def _hash_u32(x):
    """lowbias32-style avalanche hash on uint32 vectors."""
    x = x ^ (x >> 16)
    x = x * jnp.uint32(0x7FEB352D)
    x = x ^ (x >> 15)
    x = x * jnp.uint32(0x846CA68B)
    x = x ^ (x >> 16)
    return x


# ---------------------------------------------------------------------------
# Pallas kernel
# ---------------------------------------------------------------------------
def _sinegen_kernel(seed_ref, x_ref, sine_ref, noise_ref, rep_sc,
                    *, upp, R, scale, sine_amp, noise_std):
    i = pl.program_id(0)              # row block   (parallel)
    j = pl.program_id(1)              # time tile   (sequential per row block)
    rows, tt = sine_ref.shape
    lt = rep_sc.shape[0]

    # nearest-repeat selection matrix rep[r, c] = 1.0 iff c // upp == r,
    # generated once per row block into persistent VMEM scratch (no HBM stream,
    # no integer division).
    @pl.when(j == 0)
    def _build_rep():
        r_idx = jax.lax.broadcasted_iota(jnp.int32, (lt, tt), 0)
        c_idx = jax.lax.broadcasted_iota(jnp.int32, (lt, tt), 1)
        start = r_idx * upp
        rep_sc[...] = ((c_idx >= start) & (c_idx < start + upp)).astype(jnp.float32)

    # one fused frame->sample nearest upsample: [rad, cum, rad_next, uv, frame_idx]
    x = x_ref[0, 0]                                              # (4R+1, Lt)
    up = jnp.dot(x, rep_sc[...], preferred_element_type=jnp.float32)  # (4R+1, tt)
    rad_up = up[0:R]                  # rad[l],  l = t // upp
    c_up = up[R:2 * R]                # cum[l]
    rn_up = up[2 * R:3 * R]           # rad[l+1]  (0 at l = L-1)
    uv_up = up[3 * R:4 * R]           # voiced mask (exact 0/1)
    l_up = up[4 * R:4 * R + 1]        # frame index l, exact integer in f32

    # per-sample quantities from iota (no streamed frac/sel vectors)
    lane = jax.lax.broadcasted_iota(jnp.int32, (1, tt), 1)
    t_f = (j * tt + lane).astype(jnp.float32)                    # global sample idx
    pos = t_f * scale                       # align_corners=True source position
    lo = jnp.floor(pos)
    frac = pos - lo
    sel = lo >= l_up                        # lo == l (else lo == l - 1)
    k = t_f - l_up * float(upp)             # t % upp, exact

    # closed-form phase (replaces the per-sample log-step scan)
    cum_rad = c_up + (k + float(1 - upp)) * rad_up               # cumsum(rad_up)[t]
    a = jnp.where(sel, c_up, c_up - float(upp) * rad_up)         # cum[lo]
    delta = jnp.where(sel, rn_up, rad_up) * float(upp)           # cum[hi] - cum[lo]
    wrap = jnp.floor(a + frac * delta)                           # integer wrap count
    sine = jnp.sin((cum_rad - wrap) * (2.0 * math.pi)) * sine_amp

    # Gaussian-ish dither: counter-hash + Irwin-Hall(4) byte sum (no exp/log/sqrt).
    # TODO(synk): torch.randn_like replaced by this in-kernel approximation.
    seed_u = seed_ref[0].astype(jnp.uint32)
    r_g = (i * R + jax.lax.broadcasted_iota(jnp.int32, (rows, tt), 0)).astype(jnp.uint32)
    c_g = (j * tt + jax.lax.broadcasted_iota(jnp.int32, (rows, tt), 1)).astype(jnp.uint32)
    h = _hash_u32(r_g * jnp.uint32(0x9E3779B1) + c_g + seed_u)
    ssum = ((h & jnp.uint32(0xFF)) + ((h >> 8) & jnp.uint32(0xFF))
            + ((h >> 16) & jnp.uint32(0xFF)) + (h >> 24)).astype(jnp.int32)
    gauss = (ssum.astype(jnp.float32) - _IH4_MEAN) * _IH4_INV_STD

    voiced = uv_up > 0.5
    noise = jnp.where(voiced, noise_std, sine_amp / 3.0) * gauss
    sine_ref[...] = jnp.where(voiced, sine, 0.0) + noise
    noise_ref[...] = noise


# ---------------------------------------------------------------------------
# Wrapper mirroring SineGen.forward(f0, upp) -> (sine_waves, uv, noise)
# ---------------------------------------------------------------------------
def sine_gen_forward(f0, upp, key, *, samp_rate, harmonic_num=0, sine_amp=0.1,
                     noise_std=0.003, voiced_threshold=0.0, rand_ini=None,
                     tile_target_t=2048, row_target=128, channels_last=True):
    """f0: (B, L) frame-rate F0; upp: int upsample factor (hop size).

    Returns (sine, uv, noise) in the PyTorch layout (B, T, D)/(B, T, 1) when
    channels_last=True; channels_last=False keeps the lane-dense (B, D, T)
    layout and skips the post-kernel transposes (cheaper, esp. on v5e)."""
    f0 = jnp.asarray(f0, jnp.float32)
    upp = int(upp)
    B, L = f0.shape
    D = int(harmonic_num) + 1
    T = L * upp
    BD = B * D

    # ---------------- frame-rate prep (tiny, plain JAX) ----------------
    k_rand, k_seed = jax.random.split(key)
    if rand_ini is None:
        # TODO(synk): torch.rand uses the global torch RNG; reproduced with JAX.
        rand_ini = jax.random.uniform(k_rand, (B, D), dtype=jnp.float32)
        rand_ini = rand_ini.at[:, 0].set(0.0)

    harm = jnp.arange(1, D + 1, dtype=jnp.float32)
    f0_buf = f0[:, None, :] * harm[None, :, None]                 # (B, D, L)
    rad = jnp.mod(f0_buf / float(samp_rate), 1.0)
    rad = rad.at[:, :, 0].add(rand_ini)                           # initial phase
    # NOTE: cum grows with signal length (same precision caveat as PyTorch).
    cum = jnp.cumsum(rad, axis=2) * float(upp)                    # frame-level phase
    rad_next = jnp.concatenate(
        [rad[:, :, 1:], jnp.zeros((B, D, 1), jnp.float32)], axis=2)  # rad[l+1], clamp
    uv = (f0 > float(voiced_threshold)).astype(jnp.float32)       # (B, L)
    uv_d = jnp.broadcast_to(uv[:, None, :], (B, D, L))

    # ---------------- tiling ----------------
    Lt, Tt = _choose_time_tile(L, upp, tile_target_t)
    L_pad = pl.cdiv(L, Lt) * Lt
    T_pad = L_pad * upp
    n_tiles = L_pad // Lt
    R = _choose_rows(BD, row_target)
    n_rblk = BD // R

    def to2(x):                       # (B, D, L) -> (BD, L_pad), zero-padded frames
        x = x.reshape(BD, L)
        if L_pad > L:
            x = jnp.pad(x, ((0, 0), (0, L_pad - L)))
        return x

    frame_idx = jnp.arange(L_pad, dtype=jnp.float32)
    chan = jnp.stack([to2(rad), to2(cum), to2(rad_next), to2(uv_d)], axis=0)
    chan = (chan.reshape(4, n_rblk, R, L_pad)
                .transpose(1, 0, 2, 3)
                .reshape(n_rblk, 4 * R, L_pad))
    stack = jnp.concatenate(
        [chan, jnp.broadcast_to(frame_idx[None, None, :], (n_rblk, 1, L_pad))],
        axis=1)                                                  # (n_rblk, 4R+1, L_pad)
    stack = (stack.reshape(n_rblk, 4 * R + 1, n_tiles, Lt)
                  .transpose(0, 2, 1, 3))                        # (n_rblk, n_tiles, 4R+1, Lt)

    seed = jax.random.randint(k_seed, (1,), 0, jnp.iinfo(jnp.int32).max,
                              dtype=jnp.int32)

    kernel = partial(_sinegen_kernel, upp=upp, R=R,
                     scale=float((L - 1) / max(T - 1, 1)),
                     sine_amp=float(sine_amp), noise_std=float(noise_std))

    sine_bd, noise_bd = pl.pallas_call(
        kernel,
        out_shape=(jax.ShapeDtypeStruct((BD, T_pad), jnp.float32),
                   jax.ShapeDtypeStruct((BD, T_pad), jnp.float32)),
        grid_spec=pltpu.PrefetchScalarGridSpec(
            num_scalar_prefetch=1,
            grid=(n_rblk, n_tiles),
            in_specs=[pl.BlockSpec((1, 1, 4 * R + 1, Lt),
                                   lambda i, j, *_: (i, j, 0, 0))],
            out_specs=[pl.BlockSpec((R, Tt), lambda i, j, *_: (i, j)),
                       pl.BlockSpec((R, Tt), lambda i, j, *_: (i, j))],
            scratch_shapes=[pltpu.VMEM((Lt, Tt), jnp.float32)],   # rep matrix
        ),
        compiler_params=pltpu.CompilerParams(
            dimension_semantics=("parallel", "arbitrary"),
            vmem_limit_bytes=48 * 1024 * 1024),
    )(seed, stack)

    sine = sine_bd[:, :T].reshape(B, D, T)
    noise = noise_bd[:, :T].reshape(B, D, T)
    uv_up = jnp.repeat(uv, upp, axis=1)                           # (B, T)

    if channels_last:                                             # PyTorch layout
        return (jnp.transpose(sine, (0, 2, 1)),
                uv_up[:, :, None],
                jnp.transpose(noise, (0, 2, 1)))
    return sine, uv_up[:, None, :], noise


# ---------------------------------------------------------------------------
# Pure-JAX reference for the deterministic part (sine_waves * uv, uv)
# ---------------------------------------------------------------------------
def _sinegen_ref(f0, upp, rand_ini, *, samp_rate, harmonic_num, sine_amp,
                 voiced_threshold):
    f0 = jnp.asarray(f0, jnp.float32)
    B, L = f0.shape
    D = int(harmonic_num) + 1
    upp = int(upp)
    T = L * upp
    harm = jnp.arange(1, D + 1, dtype=jnp.float32)
    f0_buf = f0[:, None, :] * harm[None, :, None]
    rad = jnp.mod(f0_buf / float(samp_rate), 1.0)
    rad = rad.at[:, :, 0].add(rand_ini)
    cum = jnp.cumsum(rad, axis=2) * float(upp)
    t = np.arange(T, dtype=np.float64)
    pos = t * (L - 1) / (T - 1) if T > 1 else np.zeros_like(t)
    lo = np.clip(np.floor(pos), 0, L - 1).astype(np.int32)
    hi = np.minimum(lo + 1, L - 1).astype(np.int32)
    fr = jnp.asarray((pos - lo).astype(np.float32))[None, None, :]
    a = jnp.take(cum, jnp.asarray(lo), axis=2)
    b = jnp.take(cum, jnp.asarray(hi), axis=2)
    tmp = jnp.mod((1.0 - fr) * a + fr * b, 1.0)
    wrap = jnp.concatenate(
        [jnp.zeros((B, D, 1), jnp.float32),
         (tmp[:, :, 1:] - tmp[:, :, :-1] < 0.0).astype(jnp.float32)], axis=2)
    rad_up = jnp.repeat(rad, upp, axis=2)
    phase = jnp.cumsum(rad_up - wrap, axis=2)
    sine = jnp.sin(phase * (2.0 * math.pi)) * float(sine_amp)
    uv = (f0 > float(voiced_threshold)).astype(jnp.float32)
    uv_up = jnp.repeat(uv, upp, axis=1)
    return sine * uv_up[:, None, :], uv_up


if __name__ == "__main__":
    B, L, upp = 2, 32, 8              # small sizes: T = 256 -> two 128-sample tiles
    harmonic_num = 7                  # D = 8
    samp_rate = 16000
    D = harmonic_num + 1
    T = L * upp

    key = jax.random.PRNGKey(0)
    k_f0, k_v, k_ri, k_fwd = jax.random.split(key, 4)
    f0 = jax.random.uniform(k_f0, (B, L), minval=80.0, maxval=400.0)
    voiced = (jax.random.uniform(k_v, (B, L)) > 0.25).astype(jnp.float32)
    f0 = f0 * voiced                  # unvoiced frames carry f0 == 0
    rand_ini = jax.random.uniform(k_ri, (B, D), dtype=jnp.float32).at[:, 0].set(0.0)

    sine, uv, noise = sine_gen_forward(
        f0, upp, k_fwd, samp_rate=samp_rate, harmonic_num=harmonic_num,
        sine_amp=0.1, noise_std=0.003, voiced_threshold=0.0,
        rand_ini=rand_ini, tile_target_t=128, row_target=8)
    jax.block_until_ready((sine, uv, noise))

    assert sine.shape == (B, T, D)
    assert uv.shape == (B, T, 1)
    assert noise.shape == (B, T, D)
    assert bool(jnp.all(jnp.isfinite(sine)))
    assert bool(jnp.all(jnp.isfinite(noise)))
    assert bool(jnp.all((uv == 0.0) | (uv == 1.0)))

    # deterministic part of the output (sine - noise == sine_waves * uv) vs a
    # pure-JAX reference of the original PyTorch computation
    det = jnp.transpose(sine - noise, (0, 2, 1))                  # (B, D, T)
    ref_det, ref_uv = _sinegen_ref(
        f0, upp, rand_ini, samp_rate=samp_rate, harmonic_num=harmonic_num,
        sine_amp=0.1, voiced_threshold=0.0)
    max_err = float(jnp.max(jnp.abs(det - ref_det)))
    assert max_err < 2e-3, f"sine mismatch vs reference: {max_err}"
    assert bool(jnp.all(uv[:, :, 0] == ref_uv))

    # noise sanity: zero-mean-ish, scaled by voiced/unvoiced amplitude
    assert float(jnp.max(jnp.abs(noise))) < 0.2

    print("KERNEL_OK")
</pallas_src>

<mosaic_0001>
module attributes {stable_mosaic.version = 11 : i64} {
  func.func @_sinegen_kernel(%arg0: i32, %arg1: i32, %arg2: memref<1xi32, #tpu.memory_space<smem>>, %arg3: memref<1x1x33x16xf32, #tpu.memory_space<vmem>>, %arg4: memref<8x128xf32, #tpu.memory_space<vmem>>, %arg5: memref<8x128xf32, #tpu.memory_space<vmem>>, %arg6: memref<16x128xf32, #tpu.memory_space<vmem>>) attributes {dimension_semantics = [#tpu.dimension_semantics<parallel>, #tpu.dimension_semantics<arbitrary>], iteration_bounds = array<i64: 2, 2>, scalar_prefetch = 1 : i64, scratch_operands = 1 : i64, tpu.core_type = #tpu.core_type<tc>, window_params = [{transform_indices = @transform_0, window_bounds = array<i64: 1, 1, 33, 16>}, {transform_indices = @transform_1, window_bounds = array<i64: 8, 128>}, {transform_indices = @transform_2, window_bounds = array<i64: 8, 128>}]} {
    %c0_i32 = arith.constant 0 : i32
    %0 = arith.cmpi eq, %arg1, %c0_i32 : i32
    %1 = arith.extui %0 : i1 to i32
    %c0_i32_0 = arith.constant 0 : i32
    %2 = arith.cmpi ne, %1, %c0_i32_0 : i32
    scf.if %2 {
      %109 = tpu.iota {dimensions = array<i32: 0>} : vector<16x128xi32>
      %110 = tpu.iota {dimensions = array<i32: 1>} : vector<16x128xi32>
      %c8_i32_30 = arith.constant 8 : i32
      %111 = vector.broadcast %c8_i32_30 : i32 to vector<16x128xi32>
      %112 = arith.muli %109, %111 : vector<16x128xi32>
      %113 = arith.cmpi sge, %110, %112 : vector<16x128xi32>
      %c8_i32_31 = arith.constant 8 : i32
      %114 = vector.broadcast %c8_i32_31 : i32 to vector<16x128xi32>
      %115 = arith.addi %112, %114 : vector<16x128xi32>
      %116 = arith.cmpi slt, %110, %115 : vector<16x128xi32>
      %117 = arith.andi %113, %116 : vector<16x128xi1>
      %118 = arith.extui %117 : vector<16x128xi1> to vector<16x128xi32>
      %119 = arith.sitofp %118 : vector<16x128xi32> to vector<16x128xf32>
      %c0_32 = arith.constant 0 : index
      %c0_33 = arith.constant 0 : index
      %120 = vector.load %arg6[%c0_32, %c0_33] : memref<16x128xf32, #tpu.memory_space<vmem>>, vector<16x128xf32>
      tpu.vector_store %arg6[%c0_32, %c0_33], %119 {strides = array<i32>} : memref<16x128xf32, #tpu.memory_space<vmem>>, vector<16x128xf32>,
    } else {
    }
    %c0 = arith.constant 0 : index
    %c0_1 = arith.constant 0 : index
    %c0_2 = arith.constant 0 : index
    %c0_3 = arith.constant 0 : index
    %3 = vector.load %arg3[%c0, %c0_1, %c0_2, %c0_3] : memref<1x1x33x16xf32, #tpu.memory_space<vmem>>, vector<1x1x33x16xf32>
    %4 = vector.shape_cast %3 : vector<1x1x33x16xf32> to vector<33x16xf32>
    %c0_4 = arith.constant 0 : index
    %c0_5 = arith.constant 0 : index
    %5 = vector.load %arg6[%c0_4, %c0_5] : memref<16x128xf32, #tpu.memory_space<vmem>>, vector<16x128xf32>
    %cst = arith.constant dense<0.000000e+00> : vector<33x128xf32>
    %6 = tpu.matmul %4, %5, %cst {dimension_numbers = #tpu.dot_dimension_numbers<[1], [0], [0], [1], [0, 0, 1, 1], [], []>} : vector<33x16xf32>, vector<16x128xf32>, vector<33x128xf32> -> vector<33x128xf32>
    %7 = vector.extract_strided_slice %6 {offsets = [0, 0], sizes = [8, 128], strides = [1, 1]} : vector<33x128xf32> to vector<8x128xf32>
    %8 = vector.extract_strided_slice %6 {offsets = [8, 0], sizes = [8, 128], strides = [1, 1]} : vector<33x128xf32> to vector<8x128xf32>
    %9 = vector.extract_strided_slice %6 {offsets = [16, 0], sizes = [8, 128], strides = [1, 1]} : vector<33x128xf32> to vector<8x128xf32>
    %10 = vector.extract_strided_slice %6 {offsets = [24, 0], sizes = [8, 128], strides = [1, 1]} : vector<33x128xf32> to vector<8x128xf32>
    %11 = vector.extract_strided_slice %6 {offsets = [32, 0], sizes = [1, 128], strides = [1, 1]} : vector<33x128xf32> to vector<1x128xf32>
    %12 = tpu.iota {dimensions = array<i32: 1>} : vector<1x128xi32>
    %c128_i32 = arith.constant 128 : i32
    %13 = arith.muli %arg1, %c128_i32 : i32
    %14 = vector.broadcast %13 : i32 to vector<1x128xi32>
    %15 = arith.addi %14, %12 : vector<1x128xi32>
    %16 = arith.sitofp %15 : vector<1x128xi32> to vector<1x128xf32>
    %cst_6 = arith.constant 0.121568628 : f32
    %17 = vector.broadcast %cst_6 : f32 to vector<1x128xf32>
    %18 = arith.mulf %16, %17 : vector<1x128xf32>
    %19 = math.floor %18 : vector<1x128xf32>
    %20 = arith.subf %18, %19 : vector<1x128xf32>
    %21 = arith.cmpf oge, %19, %11 : vector<1x128xf32>
    %cst_7 = arith.constant 8.000000e+00 : f32
    %22 = vector.broadcast %cst_7 : f32 to vector<1x128xf32>
    %23 = arith.mulf %11, %22 : vector<1x128xf32>
    %24 = arith.subf %16, %23 : vector<1x128xf32>
    %cst_8 = arith.constant -7.000000e+00 : f32
    %25 = vector.broadcast %cst_8 : f32 to vector<1x128xf32>
    %26 = arith.addf %24, %25 : vector<1x128xf32>
    %27 = vector.broadcast %26 : vector<1x128xf32> to vector<8x128xf32>
    %28 = arith.mulf %27, %7 : vector<8x128xf32>
    %29 = arith.addf %8, %28 : vector<8x128xf32>
    %cst_9 = arith.constant 8.000000e+00 : f32
    %30 = vector.broadcast %cst_9 : f32 to vector<8x128xf32>
    %31 = arith.mulf %30, %7 : vector<8x128xf32>
    %32 = arith.subf %8, %31 : vector<8x128xf32>
    %33 = vector.shape_cast %21 : vector<1x128xi1> to vector<1x128xi1>
    %34 = vector.broadcast %33 : vector<1x128xi1> to vector<8x128xi1>
    %35 = arith.select %34, %8, %32 : vector<8x128xi1>, vector<8x128xf32>
    %36 = vector.shape_cast %21 : vector<1x128xi1> to vector<1x128xi1>
    %37 = vector.broadcast %36 : vector<1x128xi1> to vector<8x128xi1>
    %38 = arith.select %37, %9, %7 : vector<8x128xi1>, vector<8x128xf32>
    %cst_10 = arith.constant 8.000000e+00 : f32
    %39 = vector.broadcast %cst_10 : f32 to vector<8x128xf32>
    %40 = arith.mulf %38, %39 : vector<8x128xf32>
    %41 = vector.broadcast %20 : vector<1x128xf32> to vector<8x128xf32>
    %42 = arith.mulf %41, %40 : vector<8x128xf32>
    %43 = arith.addf %35, %42 : vector<8x128xf32>
    %44 = math.floor %43 : vector<8x128xf32>
    %45 = arith.subf %29, %44 : vector<8x128xf32>
    %cst_11 = arith.constant 6.28318548 : f32
    %46 = vector.broadcast %cst_11 : f32 to vector<8x128xf32>
    %47 = arith.mulf %45, %46 : vector<8x128xf32>
    %48 = math.sin %47 : vector<8x128xf32>
    %cst_12 = arith.constant 1.000000e-01 : f32
    %49 = vector.broadcast %cst_12 : f32 to vector<8x128xf32>
    %50 = arith.mulf %48, %49 : vector<8x128xf32>
    %c0_13 = arith.constant 0 : index
    %51 = memref.load %arg2[%c0_13] : memref<1xi32, #tpu.memory_space<smem>>
    %c8_i32 = arith.constant 8 : i32
    %52 = arith.muli %arg0, %c8_i32 : i32
    %53 = tpu.iota {dimensions = array<i32: 0>} : vector<8x128xi32>
    %54 = vector.broadcast %52 : i32 to vector<8x128xi32>
    %55 = arith.addi %54, %53 : vector<8x128xi32>
    %c128_i32_14 = arith.constant 128 : i32
    %56 = arith.muli %arg1, %c128_i32_14 : i32
    %57 = tpu.iota {dimensions = array<i32: 1>} : vector<8x128xi32>
    %58 = vector.broadcast %56 : i32 to vector<8x128xi32>
    %59 = arith.addi %58, %57 : vector<8x128xi32>
    %c-1640531535_i32 = arith.constant -1640531535 : i32
    %60 = vector.broadcast %c-1640531535_i32 : i32 to vector<8x128xi32>
    %61 = arith.muli %55, %60 : vector<8x128xi32>
    %62 = arith.addi %61, %59 : vector<8x128xi32>
    %63 = vector.broadcast %51 : i32 to vector<8x128xi32>
    %64 = arith.addi %62, %63 : vector<8x128xi32>
    %c16_i32 = arith.constant 16 : i32
    %65 = vector.broadcast %c16_i32 : i32 to vector<8x128xi32>
    %66 = arith.shrui %64, %65 : vector<8x128xi32>
    %67 = arith.xori %64, %66 : vector<8x128xi32>
    %c2146121005_i32 = arith.constant 2146121005 : i32
    %68 = vector.broadcast %c2146121005_i32 : i32 to vector<8x128xi32>
    %69 = arith.muli %67, %68 : vector<8x128xi32>
    %c15_i32 = arith.constant 15 : i32
    %70 = vector.broadcast %c15_i32 : i32 to vector<8x128xi32>
    %71 = arith.shrui %69, %70 : vector<8x128xi32>
    %72 = arith.xori %69, %71 : vector<8x128xi32>
    %c-2073254261_i32 = arith.constant -2073254261 : i32
    %73 = vector.broadcast %c-2073254261_i32 : i32 to vector<8x128xi32>
    %74 = arith.muli %72, %73 : vector<8x128xi32>
    %c16_i32_15 = arith.constant 16 : i32
    %75 = vector.broadcast %c16_i32_15 : i32 to vector<8x128xi32>
    %76 = arith.shrui %74, %75 : vector<8x128xi32>
    %77 = arith.xori %74, %76 : vector<8x128xi32>
    %c255_i32 = arith.constant 255 : i32
    %78 = vector.broadcast %c255_i32 : i32 to vector<8x128xi32>
    %79 = arith.andi %77, %78 : vector<8x128xi32>
    %c8_i32_16 = arith.constant 8 : i32
    %80 = vector.broadcast %c8_i32_16 : i32 to vector<8x128xi32>
    %81 = arith.shrui %77, %80 : vector<8x128xi32>
    %c255_i32_17 = arith.constant 255 : i32
    %82 = vector.broadcast %c255_i32_17 : i32 to vector<8x128xi32>
    %83 = arith.andi %81, %82 : vector<8x128xi32>
    %84 = arith.addi %79, %83 : vector<8x128xi32>
    %c16_i32_18 = arith.constant 16 : i32
    %85 = vector.broadcast %c16_i32_18 : i32 to vector<8x128xi32>
    %86 = arith.shrui %77, %85 : vector<8x128xi32>
    %c255_i32_19 = arith.constant 255 : i32
    %87 = vector.broadcast %c255_i32_19 : i32 to vector<8x128xi32>
    %88 = arith.andi %86, %87 : vector<8x128xi32>
    %89 = arith.addi %84, %88 : vector<8x128xi32>
    %c24_i32 = arith.constant 24 : i32
    %90 = vector.broadcast %c24_i32 : i32 to vector<8x128xi32>
    %91 = arith.shrui %77, %90 : vector<8x128xi32>
    %92 = arith.addi %89, %91 : vector<8x128xi32>
    %93 = arith.sitofp %92 : vector<8x128xi32> to vector<8x128xf32>
    %cst_20 = arith.constant 5.100000e+02 : f32
    %94 = vector.broadcast %cst_20 : f32 to vector<8x128xf32>
    %95 = arith.subf %93, %94 : vector<8x128xf32>
    %cst_21 = arith.constant 0.00676587503 : f32
    %96 = vector.broadcast %cst_21 : f32 to vector<8x128xf32>
    %97 = arith.mulf %95, %96 : vector<8x128xf32>
    %cst_22 = arith.constant 5.000000e-01 : f32
    %98 = vector.broadcast %cst_22 : f32 to vector<8x128xf32>
    %99 = arith.cmpf ogt, %10, %98 : vector<8x128xf32>
    %cst_23 = arith.constant 3.000000e-03 : f32
    %cst_24 = arith.constant 0.0333333351 : f32
    %100 = vector.broadcast %cst_23 : f32 to vector<8x128xf32>
    %101 = vector.broadcast %cst_24 : f32 to vector<8x128xf32>
    %102 = arith.select %99, %100, %101 : vector<8x128xi1>, vector<8x128xf32>
    %103 = arith.mulf %102, %97 : vector<8x128xf32>
    %cst_25 = arith.constant 0.000000e+00 : f32
    %104 = vector.broadcast %cst_25 : f32 to vector<8x128xf32>
    %105 = arith.select %99, %50, %104 : vector<8x128xi1>, vector<8x128xf32>
    %106 = arith.addf %105, %103 : vector<8x128xf32>
    %c0_26 = arith.constant 0 : index
    %c0_27 = arith.constant 0 : index
    %107 = vector.load %arg4[%c0_26, %c0_27] : memref<8x128xf32, #tpu.memory_space<vmem>>, vector<8x128xf32>
    tpu.vector_store %arg4[%c0_26, %c0_27], %106 {strides = array<i32>} : memref<8x128xf32, #tpu.memory_space<vmem>>, vector<8x128xf32>,
    %c0_28 = arith.constant 0 : index
    %c0_29 = arith.constant 0 : index
    %108 = vector.load %arg5[%c0_28, %c0_29] : memref<8x128xf32, #tpu.memory_space<vmem>>, vector<8x128xf32>
    tpu.vector_store %arg5[%c0_28, %c0_29], %103 {strides = array<i32>} : memref<8x128xf32, #tpu.memory_space<vmem>>, vector<8x128xf32>,
    return
  }
  func.func @transform_0(%arg0: i32, %arg1: i32, %arg2: memref<1xi32, #tpu.memory_space<smem>>) -> (i32, i32, i32, i32) {
    %c0_i32 = arith.constant 0 : i32
    %c0_i32_0 = arith.constant 0 : i32
    %c0_i32_1 = arith.constant 0 : i32
    return %arg0, %arg1, %c0_i32, %c0_i32_0 : i32, i32, i32, i32
  }
  func.func @transform_1(%arg0: i32, %arg1: i32, %arg2: memref<1xi32, #tpu.memory_space<smem>>) -> (i32, i32) {
    %c0_i32 = arith.constant 0 : i32
    return %arg0, %arg1 : i32, i32
  }
  func.func @transform_2(%arg0: i32, %arg1: i32, %arg2: memref<1xi32, #tpu.memory_space<smem>>) -> (i32, i32) {
    %c0_i32 = arith.constant 0 : i32
    return %arg0, %arg1 : i32, i32
  }
}

</mosaic_0001>

<llo_original>
// kernel: tpu_custom_call.1
$region0: #{tpu_custom_call.1}
  #allocation0 [shape = 'u32[]', space=smem, size = 0x4, offset = 0x4, fixed_abs, tag = 'smem constant byte address 0x4 - core index']
  #allocation1 [shape = 'u32[144,128]{1,0:T(1,128)}', space=vmem, size = 0x12000, scoped, tag = 'internal scratch']
  #allocation2 [shape = 'f32[16,128]{1,0:T(8,128)}', space=vmem, size = 0x2000, scoped, tag = 'scratch operand']
  #allocation3 [shape = 's32[1]{0}', space=sflag, size = 0x4, scoped, tag = 'scoped memory for tpu_custom_call.1']
  #allocation4 [shape = 's32[1]{0:T(128)S(6)}', space=smem, size = 0x200, scoped, tag = 'prefetched SMEM operand 0']
  %s0 = inlined_call_operand.<no memory space> [shape: s32[1], index: 0, kind: input, shape index: {}]
  %s1 = inlined_call_operand.vmem [shape: f32[2,2,33,16], index: 1, kind: input, shape index: {}]
  %s2 = inlined_call_operand.hbm [shape: f32[16,256], index: 2, kind: output, shape index: {0}]
  %s3 = inlined_call_operand.hbm [shape: f32[16,256], index: 3, kind: output, shape index: {1}]
  %4 = xla_tuple %s2, %s3
  %s5 = sld [smem:[#allocation0]]
  $region49: #{tpu_custom_call.1} parent=0
    _
  %s7 = ssub.s32 1, %s5
  %s8 = scalar_select 0, %s7, %s5
  %9 = sst [smem:[#allocation4]] %s0
  $region1: #{tpu_custom_call.1} parent=0
    #allocation5 [shape = 'u8[8192]{0}', space=vmem, size = 0x2000, scoped, tag = 'output window, operand 0']
    #allocation6 [shape = 's32[2]{0}', space=sflag, size = 0x8, scoped, tag = 'scoped memory for tpu_custom_call.1']
    #allocation7 [shape = 'u8[8192]{0}', space=vmem, size = 0x2000, scoped, tag = 'output window, operand 1']
    #allocation8 [shape = 's32[2]{0}', space=sflag, size = 0x8, scoped, tag = 'scoped memory for tpu_custom_call.1']
    %10 = vsyncpa [#allocation6], 0
    %s11 = scalar_lea.sflag [#allocation6], 1
    %12 = vsyncpa %s11, 0
    %13 = vsyncpa [#allocation8], 0
    %s14 = scalar_lea.sflag [#allocation8], 1
    %15 = vsyncpa %s14, 0
    loop: start=0, step=1, limit=6
    $region2: #{tpu_custom_call.1} parent=1 // loop_pre_header
      _
    $region3: #{tpu_custom_call.1} parent=1 // loop_header
      %s17 = sphi 0, %s21
      %p18 = scmp.ge.s32.totalorder %s17, 6
      %s24 = sphi 0, %s36
      %s25 = sphi 0, %s32
      %s26 = sphi 0, %s24
      %s27 = sphi 0, %s25
      %s28 = sphi 0, %s26
      %s29 = sphi 0, %s27
      %s41 = sphi 0, %s43
      %s44 = sphi 0, %s41
      %s45 = sphi 0, %s44
      %s61 = sphi 0, %s45
      %s69 = sphi 0, %s71
      %s72 = sphi 0, %s69
      %s73 = sphi 0, %s72
      %s89 = sphi 0, %s73
      %s97 = sphi 0, %s99
      %s100 = sphi 0, %s97
      %s101 = sphi 0, %s100
      %s117 = sphi 0, %s101
    $region4: #{tpu_custom_call.1} parent=1 // loop_header_branch
      %20 = sbr.rel (%p18) target = $region8
    $region5: #{tpu_custom_call.1} parent=1 // loop_body
      %s22 = ssub.s32 %s17, 1
      %s23 = ssub.s32 %s17, 2
      %s30 = sadd.s32 1, %s25
      %p31 = scmp.ge.s32.totalorder %s30, 2
      %s32 = scalar_select %p31, 0, %s30
      %s33 = sadd.s32 1, %s24
      %s34 = scalar_select %p31, %s33, %s24
      %p35 = scmp.ge.s32.totalorder %s34, 2
      %s36 = scalar_select %p35, 0, %s34
      %s37 = ssub.s32 %s24, %s36
      %s38 = ssub.s32 %s25, %s32
      %s39 = sor.u32 %s37, %s38
      %p40 = scmp.eq.s32.totalorder %s39, 0
      %s42 = sadd.s32 %s41, 1
      %s43 = scalar_select %p40, %s41, %s42
      %p46 = pneg %p40
      %p47 = scmp.eq.s32.totalorder %s17, 3
      %p48 = por %p46, %p47
      %p49 = scmp.ne.s32.totalorder %s41, %s44
      %p50 = scmp.eq.s32.totalorder %s17, 0
      %p51 = por %p49, %p50
      %p52 = scmp.ne.s32.totalorder %s41, %s44
      %p53 = scmp.eq.s32.totalorder %s22, 3
      %p54 = por %p52, %p53
      %p55 = scmp.ne.s32.totalorder %s44, %s45
      %p56 = scmp.eq.s32.totalorder %s22, 0
      %p57 = por %p55, %p56
      %p58 = scmp.ne.s32.totalorder %s44, %s45
      %p59 = scmp.eq.s32.totalorder %s23, 3
      %p60 = por %p58, %p59
      %p62 = scmp.ne.s32.totalorder %s45, %s61
      %p63 = scmp.eq.s32.totalorder %s23, 0
      %p64 = por %p62, %p63
      %s65 = ssub.s32 %s24, %s36
      %s66 = ssub.s32 %s25, %s32
      %s67 = sor.u32 %s65, %s66
      %p68 = scmp.eq.s32.totalorder %s67, 0
      %s70 = sadd.s32 %s69, 1
      %s71 = scalar_select %p68, %s69, %s70
      %p74 = pneg %p68
      %p75 = scmp.eq.s32.totalorder %s17, 3
      %p76 = por %p74, %p75
      %p77 = scmp.ne.s32.totalorder %s69, %s72
      %p78 = scmp.eq.s32.totalorder %s17, 0
      %p79 = por %p77, %p78
      %p80 = scmp.ne.s32.totalorder %s69, %s72
      %p81 = scmp.eq.s32.totalorder %s22, 3
      %p82 = por %p80, %p81
      %p83 = scmp.ne.s32.totalorder %s72, %s73
      %p84 = scmp.eq.s32.totalorder %s22, 0
      %p85 = por %p83, %p84
      %p86 = scmp.ne.s32.totalorder %s72, %s73
      %p87 = scmp.eq.s32.totalorder %s23, 3
      %p88 = por %p86, %p87
      %p90 = scmp.ne.s32.totalorder %s73, %s89
      %p91 = scmp.eq.s32.totalorder %s23, 0
      %p92 = por %p90, %p91
      %s93 = ssub.s32 %s24, %s36
      %s94 = ssub.s32 %s25, %s32
      %s95 = sor.u32 %s93, %s94
      %p96 = scmp.eq.s32.totalorder %s95, 0
      %s98 = sadd.s32 %s97, 1
      %s99 = scalar_select %p96, %s97, %s98
      %p102 = pneg %p96
      %p103 = scmp.eq.s32.totalorder %s17, 3
      %p104 = por %p102, %p103
      %p105 = scmp.ne.s32.totalorder %s97, %s100
      %p106 = scmp.eq.s32.totalorder %s17, 0
      %p107 = por %p105, %p106
      %p108 = scmp.ne.s32.totalorder %s97, %s100
      %p109 = scmp.eq.s32.totalorder %s22, 3
      %p110 = por %p108, %p109
      %p111 = scmp.ne.s32.totalorder %s100, %s101
      %p112 = scmp.eq.s32.totalorder %s22, 0
      %p113 = por %p111, %p112
      %p114 = scmp.ne.s32.totalorder %s100, %s101
      %p115 = scmp.eq.s32.totalorder %s23, 3
      %p116 = por %p114, %p115
      %p118 = scmp.ne.s32.totalorder %s101, %s117
      %p119 = scmp.eq.s32.totalorder %s23, 0
      %p120 = por %p118, %p119
      %p121 = scmp.le.s32.totalorder 1, %s17
      %p122 = scmp.lt.s32.totalorder %s17, 5
      %p123 = pnand %p121, %p122
      %p124 = pneg %p123
      // Predicated region
      $region9: #{tpu_custom_call.1} parent=5 // pred_check
        _
      $region10: #{tpu_custom_call.1} parent=5 // pred_check_branch
        %126 = sbr.rel (%p123) target = $region12
      $region11: #{tpu_custom_call.1} parent=5 // pred_region
        %s127 = ssub.s32 %s17, 1
      $region12: #{tpu_custom_call.1} parent=5 // pred_fallthru
        _
      %p128 = scmp.lt.s32.totalorder %s17, 4
      // Predicated region
      $region13: #{tpu_custom_call.1} parent=5 // pred_check
        %p129 = pneg %p128
      $region14: #{tpu_custom_call.1} parent=5 // pred_check_branch
        %131 = sbr.rel (%p129) target = $region16
      $region15: #{tpu_custom_call.1} parent=5 // pred_region
        // Predicated region
        $region17: #{tpu_custom_call.1} parent=15 // pred_check
          %p132 = pneg %p51
        $region18: #{tpu_custom_call.1} parent=15 // pred_check_branch
          %134 = sbr.rel (%p132) target = $region20
        $region19: #{tpu_custom_call.1} parent=15 // pred_region
          %p135 = scmp.lt.s32.totalorder %s24, 1
          %s136 = scalar_select %p135, %s24, 1
          %p137 = scmp.lt.s32.totalorder %s25, 1
          %s138 = scalar_select %p137, %s25, 1
          %s139 = smul.addr %s138, 5
          %s140 = smul.addr %s136, 10
          %s141 = sadd.s32 %s139, %s140
          %s142 = smul.addr %s141, 8
          %s143 = scalar_lea.vmem %s1, %s142
        $region20: #{tpu_custom_call.1} parent=15 // pred_fallthru
          _
      $region16: #{tpu_custom_call.1} parent=5 // pred_fallthru
        _
      %p144 = scmp.le.s32.totalorder 1, %s17
      %p145 = scmp.lt.s32.totalorder %s17, 5
      %p146 = pnand %p144, %p145
      %p147 = pneg %p146
      // Predicated region
      $region21: #{tpu_custom_call.1} parent=5 // pred_check
        _
      $region22: #{tpu_custom_call.1} parent=5 // pred_check_branch
        %149 = sbr.rel (%p146) target = $region24
      $region23: #{tpu_custom_call.1} parent=5 // pred_region
        %s150 = ssub.s32 %s17, 1
        %p151 = scmp.lt.s32.totalorder %s26, 1
        %s152 = scalar_select %p151, %s26, 1
        %p153 = scmp.lt.s32.totalorder %s27, 1
        %s154 = scalar_select %p153, %s27, 1
        %s155 = smul.addr %s154, 5
        %s156 = smul.addr %s152, 10
        %s157 = sadd.s32 %s155, %s156
        %s158 = smul.addr %s157, 8
        %s159 = scalar_lea.vmem %s1, %s158
        %p160 = pneg %p57
        %p161 = pneg %p54
        %p162 = pneg %p85
        %p163 = pneg %p82
        %s164 = sand.u32 %s72, 1
        %s165 = scalar_lea.sflag [#allocation6], %s164
        %s166 = sand.u32 %s72, 1
        %s167 = smul.addr %s166, 8
        %s168 = scalar_lea.vmem [#allocation5], %s167
        %p169 = pneg %p113
        %p170 = pneg %p110
        %s171 = sand.u32 %s100, 1
        %s172 = scalar_lea.sflag [#allocation8], %s171
        %s173 = sand.u32 %s100, 1
        %s174 = smul.addr %s173, 8
        %s175 = scalar_lea.vmem [#allocation7], %s174
        %p176 = scmp.lt.s32.totalorder %s26, 1
        %s177 = scalar_select %p176, %s26, 1
        %p178 = scmp.lt.s32.totalorder %s27, 1
        %s179 = scalar_select %p178, %s27, 1
        %s180 = smul.addr %s179, 5
        %s181 = smul.addr %s177, 10
        %s182 = sadd.s32 %s180, %s181
        %s183 = smul.addr %s182, 8
        %s184 = scalar_lea.vmem %s1, %s183
        %p185 = scmp.eq.s32.totalorder %s27, 0
        // Predicated region
        $region25: #{tpu_custom_call.1} parent=23 // pred_check
          %p186 = pneg %p185
        $region26: #{tpu_custom_call.1} parent=23 // pred_check_branch
          %188 = sbr.rel (%p186) target = $region28
        $region27: #{tpu_custom_call.1} parent=23 // pred_region
          %v189 = vlaneseq
          %v190 = vshrl.u32 %v189, 7
          %v191 = vadd.s32 %v190, 8
          %v192 = vlaneseq
          %v193 = vand.u32 %v192, 127
          %v194 = vmul.u32 %v190, 8
          %v195 = vmul.u32 %v191, 8
          %vm196 = vcmp.ge.s32.totalorder %v193, %v194
          %vm197 = vcmp.ge.s32.totalorder %v193, %v195
          %v198 = vadd.s32 %v194, 8
          %v199 = vadd.s32 %v195, 8
          %vm200 = vcmp.lt.s32.totalorder %v193, %v198
          %vm201 = vcmp.lt.s32.totalorder %v193, %v199
          %vm202 = vmand %vm196, %vm200
          %vm203 = vmand %vm197, %vm201
          %v204 = vsel %vm202, 1, 0
          %v205 = vsel %vm203, 1, 0
          %v206 = vcvt.s32.f32 %v204
          %v207 = vcvt.s32.f32 %v205
          %208 = vst [vmem:[#allocation2] sm:$0xff] %v206
          %209 = vst [vmem:[#allocation2 + $0x8] sm:$0xff] %v207
        $region28: #{tpu_custom_call.1} parent=23 // pred_fallthru
          _
        %v210 = vld [vmem:[%s184] sm:$0xff]
        %v211 = vld [vmem:[%s184 + $0x8] sm:$0xff]
        %v212 = vld [vmem:[%s184 + $0x10] sm:$0xff]
        %v213 = vld [vmem:[%s184 + $0x18] sm:$0xff]
        %v214 = vld [vmem:[%s184 + $0x20] sm:$0x1]
        %v215 = vld [vmem:[#allocation2] sm:$0xff]
        %v216 = vld [vmem:[#allocation2 + $0x8] sm:$0xff]
        %vm217 = vcmask 130048
        %v219 = vsel %vm217, %v210, 0
        %v222 = vsel %vm217, %v211, 0
        %v225 = vsel %vm217, %v212, 0
        %v228 = vsel %vm217, %v213, 0
        %v231 = vsel %vm217, %v214, 0
        %233 = vmatprep.subr.mxu0 0.0
        %234 = vmatpush1.msra.mxu0 %v215
        %235 = vmatprep.subr.mxu0 0.0
        %236 = vmatpush1.msra.mxu0 %v216
        %237 = vmatprep.subr.mxu0 0.0
        %238 = vmatpush1.msra.mxu0 0.0
        %239 = vmatprep.subr.mxu0 0.0
        %240 = vmatpush1.msra.mxu0 0.0
        %241 = vmatprep.subr.mxu0 0.0
        %242 = vmatpush1.msra.mxu0 0.0
        %243 = vmatprep.subr.mxu0 0.0
        %244 = vmatpush1.msra.mxu0 0.0
        %245 = vmatprep.subr.mxu0 0.0
        %246 = vmatpush1.msra.mxu0 0.0
        %247 = vmatprep.subr.mxu0 0.0
        %248 = vmatpush1.msra.mxu0 0.0
        %249 = vmatprep.subr.mxu0 0.0
        %250 = vmatpush1.msra.mxu0 0.0
        %251 = vmatprep.subr.mxu0 0.0
        %252 = vmatpush1.msra.mxu0 0.0
        %253 = vmatprep.subr.mxu0 0.0
        %254 = vmatpush1.msra.mxu0 0.0
        %255 = vmatprep.subr.mxu0 0.0
        %256 = vmatpush1.msra.mxu0 0.0
        %257 = vmatprep.subr.mxu0 0.0
        %258 = vmatpush1.msra.mxu0 0.0
        %259 = vmatprep.subr.mxu0 0.0
        %260 = vmatpush1.msra.mxu0 0.0
        %261 = vmatprep.subr.mxu0 0.0
        %262 = vmatpush1.msra.mxu0 0.0
        %263 = vmatprep.subr.mxu0 0.0
        %264 = vmatpush1.msra.mxu0 0.0
        %265 = vmatprep.subr.mxu0 0.0
        %266 = vmatpush1.msra.mxu0 0.0
        %267 = vmatprep.subr.mxu0 0.0
        %268 = vmatpush1.msra.mxu0 0.0
        %269 = vmatprep.subr.mxu0 0.0
        %270 = vmatpush1.msra.mxu0 0.0
        %271 = vmatprep.subr.mxu0 0.0
        %272 = vmatpush1.msra.mxu0 0.0
        %273 = vmatprep.subr.mxu0 0.0
        %274 = vmatpush1.msra.mxu0 0.0
        %275 = vmatprep.subr.mxu0 0.0
        %276 = vmatpush1.msra.mxu0 0.0
        %277 = vmatprep.subr.mxu0 0.0
        %278 = vmatpush1.msra.mxu0 0.0
        %279 = vmatprep.subr.mxu0 0.0
        %280 = vmatpush1.msra.mxu0 0.0
        %281 = vmatprep.subr.mxu0 0.0
        %282 = vmatpush1.msra.mxu0 0.0
        %283 = vmatprep.subr.mxu0 0.0
        %284 = vmatpush1.msra.mxu0 0.0
        %285 = vmatprep.subr.mxu0 0.0
        %286 = vmatpush1.msra.mxu0 0.0
        %287 = vmatprep.subr.mxu0 0.0
        %288 = vmatpush1.msra.mxu0 0.0
        %289 = vmatprep.subr.mxu0 0.0
        %290 = vmatpush1.msra.mxu0 0.0
        %291 = vmatprep.subr.mxu0 0.0
        %292 = vmatpush1.msra.mxu0 0.0
        %293 = vmatprep.subr.mxu0 0.0
        %294 = vmatpush1.msra.mxu0 0.0
        %295 = vmatprep.subr.mxu0 0.0
        %296 = vmatpush1.msra.mxu0 0.0
        %297 = vmatprep.mubr.f32.mxu0 0.0
        %298 = vmatmul.mubr.f32.gmra.mrb[0].mxu0 %v219
        %v299 = vpop.f32.mrb[0].mxu0
        %v300 = vadd.f32 0.0, %v299
        %v301 = vpop.f32.mrb[0].mxu0
        %302 = vmatprep.mubr.f32.mxu0 0.0
        %303 = vmatmul.mubr.f32.gmra.mrb[0].mxu0 %v222
        %v304 = vpop.f32.mrb[0].mxu0
        %v305 = vadd.f32 0.0, %v304
        %v306 = vpop.f32.mrb[0].mxu0
        %307 = vmatprep.mubr.f32.mxu0 0.0
        %308 = vmatmul.mubr.f32.gmra.mrb[0].mxu0 %v225
        %v309 = vpop.f32.mrb[0].mxu0
        %v310 = vadd.f32 0.0, %v309
        %v311 = vpop.f32.mrb[0].mxu0
        %312 = vmatprep.mubr.f32.mxu0 0.0
        %313 = vmatmul.mubr.f32.gmra.mrb[0].mxu0 %v228
        %v314 = vpop.f32.mrb[0].mxu0
        %v315 = vadd.f32 0.0, %v314
        %v316 = vpop.f32.mrb[0].mxu0
        %317 = vmatprep.mubr.f32.mxu0 0.0
        %318 = vmatmul.mubr.f32.gmra.mrb[0].mxu0 %v231
        %v319 = vpop.f32.mrb[0].mxu0
        %v320 = vadd.f32 0.0, %v319
        %v321 = vpop.f32.mrb[0].mxu0
        %322 = vdwg.mxu0
        %v323 = vlaneseq
        %v324 = vand.u32 %v323, 127
        %s325 = smul.u32 %s27, 128
        %v326 = vstv %s325
        %v327 = vadd.s32 %v326, %v324
        %v328 = vcvt.s32.f32 %v327
        %v329 = vmul.f32 %v328, 0.12156863
        %v330 = vfloor.f32 %v329
        %v331 = vsub.f32 %v329, %v330
        %vm332 = vcmp.ge.f32.partialorder %v330, %v320
        %v333 = vmul.f32 %v320, 8.0
        %v334 = vsub.f32 %v328, %v333
        %v335 = vadd.f32 %v334, -7.0
        %v336 = vlaneseq
        %v337 = vshrl.u32 %v336, 7
        %v338 = vsub.s32 0, %v337
        %v339 = vrot.slane %v335, %v338
        %v340 = vmul.f32 %v339, %v300
        %v341 = vadd.f32 %v305, %v340
        %v342 = vmul.f32 %v300, 8.0
        %v343 = vsub.f32 %v305, %v342
        %v344 = vsel %vm332, 1, 0
        %v345 = vlaneseq
        %v346 = vshrl.u32 %v345, 7
        %v347 = vsub.s32 0, %v346
        %v348 = vrot.slane %v344, %v347
        %vm349 = vcmp.eq.s32.totalorder %v348, 1
        %v350 = vsel %vm349, %v305, %v343
        %v351 = vsel %vm349, %v310, %v300
        %v352 = vmul.f32 %v351, 8.0
        %v353 = vmul.f32 %v331, %v352
        %v354 = vadd.f32 %v350, %v353
        %v355 = vfloor.f32 %v354
        %v356 = vsub.f32 %v341, %v355
        %v357 = vmul.f32 %v356, 6.2831855
        %v358 = vand.u32 2147483647, %v357
        %vm359 = vcmp.le.f32.partialorder %v358, 0.7853982
        %vm360 = vcmp.lt.s32.totalorder %v357, 0
        %v361 = vand.u32 %v357, 2139095040
        %v362 = vshrl.u32 %v361, 23
        %v363 = vsub.s32 %v362, 127
        %v364 = vand.u32 2147483647, %v357
        %v365 = vand.u32 %v364, 8388607
        %v366 = vor.u32 %v365, 8388608
        %v367 = vsub.s32 0, %v366
        %v368 = vadd.s32 %v363, 1
        %vm369 = vcmp.gt.s32.totalorder %v368, 0
        %v370 = vsel %vm369, %v368, 0
        %v371 = vshrl.u32 %v370, 5
        %v372 = vand.u32 %v370, 31
        %v373 = vsub.s32 32, %v372
        %v374 = vshrl.u32 683565275, %v373
        %v375 = vshll.u32 683565275, %v372
        %v376 = vshrl.u32 2475754826, %v373
        %v377 = vor.u32 %v375, %v376
        %v378 = vshll.u32 2475754826, %v372
        %v379 = vshrl.u32 2131351028, %v373
        %v380 = vor.u32 %v378, %v379
        %v381 = vshll.u32 2131351028, %v372
        %v382 = vshrl.u32 2102212464, %v373
        %v383 = vor.u32 %v381, %v382
        %v384 = vshll.u32 2102212464, %v372
        %v385 = vshrl.u32 920167782, %v373
        %v386 = vor.u32 %v384, %v385
        %v387 = vshll.u32 920167782, %v372
        %v388 = vshrl.u32 1326507024, %v373
        %v389 = vor.u32 %v387, %v388
        %vm390 = vcmp.lt.s32.totalorder %v371, 1
        %vm391 = vcmp.lt.s32.totalorder %v371, 2
        %vm392 = vcmp.lt.s32.totalorder %v371, 3
        %vm393 = vcmp.lt.s32.totalorder %v371, 4
        %v394 = vsel %vm390, %v374, %v377
        %v395 = vsel %vm393, %v383, 2102212464
        %v396 = vsel %vm392, %v380, %v395
        %v397 = vsel %vm391, %v394, %v396
        %v398 = vsel %vm390, %v377, %v380
        %v399 = vsel %vm393, %v386, 920167782
        %v400 = vsel %vm392, %v383, %v399
        %v401 = vsel %vm391, %v398, %v400
        %v402 = vsel %vm390, %v380, %v383
        %v403 = vsel %vm393, %v389, 1326507024
        %v404 = vsel %vm392, %v386, %v403
        %v405 = vsel %vm391, %v402, %v404
        %v406 = vshll.u32 %v366, 8
        %v407 = vmul.u32.u64.compose %v406, %v405
        %v408 = vextract.low.u32 %v407
        %v409 = vextract.high.u32 %v407
        %v410 = vmul.u32.u64.compose %v406, %v401
        %v411 = vextract.low.u32 %v410
        %v412 = vextract.high.u32 %v410
        %v413 = vmul.u32 %v406, %v397
        %v414 = vadd.s32 %v409, %v411
        %vm415 = vc.u32 %v409, %v411
        %v416 = vadd.s32 %v412, 1
        %v417 = vsel %vm415, %v416, %v412
        %v418 = vadd.s32 %v413, %v417
        %v419 = vadd.s32 %v418, 536870912
        %v420 = vshrl.u32 %v419, 30
        %v421 = vshll.u32 %v420, 30
        %v422 = vsub.s32 %v418, %v421
        %vm423 = vcmp.lt.s32.totalorder %v422, 0
        %v424 = vsub.s32 0, %v422
        %v425 = vsel %vm423, %v424, %v422
        %v426 = vclz %v425
        %v427 = vsub.s32 %v426, 2
        %vm428 = vcmp.gt.s32.totalorder 0, %v427
        %v429 = vsel %vm428, 0, %v427
        %v430 = vsub.s32 32, %v429
        %v431 = vshll.u32 %v422, %v429
        %v432 = vshrl.u32 %v414, %v430
        %v433 = vor.u32 %v431, %v432
        %v434 = vsub.s32 4294967266, %v429
        %v435 = vadd.s32 %v434, 127
        %v436 = vshll.u32 %v435, 23
        %v437 = vor.u32 4788187, %v436
        %v438 = vand.u32 2147483647, %v437
        %v440 = vcvt.s32.f32 %v433
        %v441 = vmul.f32 %v440, %v438
        %v442 = vxor.u32 %v441, 2147483648
        %v443 = vsel %vm360, %v442, %v441
        %v444 = vsub.s32 4, %v420
        %v445 = vsel %vm360, %v444, %v420
        %v446 = vsel %vm359, %v357, %v443
        %v447 = vsel %vm359, 0, %v445
        %v448 = vcosq.f32.pop %v446
        %v449 = vsinq.f32.pop %v446
        %vm450 = vweird.f32 %v357
        %v451 = vadd.s32 %v447, 3
        %v452 = vand.u32 %v451, 3
        %vm453 = vcmp.lt.s32.totalorder %v452, 2
        %vm454 = vcmp.eq.s32.totalorder %v452, 0
        %v455 = vxor.u32 %v449, 2147483648
        %v456 = vsel %vm454, %v448, %v455
        %vm457 = vcmp.eq.s32.totalorder %v452, 2
        %v458 = vxor.u32 %v448, 2147483648
        %v459 = vsel %vm457, %v458, %v449
        %v460 = vsel %vm453, %v456, %v459
        %v461 = vsel %vm450, nan, %v460
        %v462 = vmul.f32 %v461, 0.1
        %s463 = sld [smem:[#allocation4]]
        %s464 = smul.u32 %s26, 8
        %v465 = vlaneseq
        %v466 = vshrl.u32 %v465, 7
        %v467 = vstv %s464
        %v468 = vadd.s32 %v467, %v466
        %v469 = vmul.u32 %v468, 2654435761
        %v470 = vadd.s32 %v469, %v327
        %v471 = vstv %s463
        %v472 = vadd.s32 %v470, %v471
        %v473 = vshrl.u32 %v472, 16
        %v474 = vxor.u32 %v472, %v473
        %v475 = vmul.u32 %v474, 2146121005
        %v476 = vshrl.u32 %v475, 15
        %v477 = vxor.u32 %v475, %v476
        %v478 = vmul.u32 %v477, 2221713035
        %v479 = vshrl.u32 %v478, 16
        %v480 = vxor.u32 %v478, %v479
        %v481 = vand.u32 %v480, 255
        %v482 = vshrl.u32 %v480, 8
        %v483 = vand.u32 %v482, 255
        %v484 = vadd.s32 %v481, %v483
        %v485 = vshrl.u32 %v480, 16
        %v486 = vand.u32 %v485, 255
        %v487 = vadd.s32 %v484, %v486
        %v488 = vshrl.u32 %v480, 24
        %v489 = vadd.s32 %v487, %v488
        %v490 = vcvt.s32.f32 %v489
        %v491 = vsub.f32 %v490, 510.0
        %v492 = vmul.f32 %v491, 0.006765875
        %vm493 = vcmp.gt.f32.partialorder %v315, 0.5
        %v494 = vsel %vm493, 0.003, 0.033333335
        %v495 = vmul.f32 %v494, %v492
        %v496 = vsel %vm493, %v462, 0.0
        %v497 = vadd.f32 %v496, %v495
        %498 = vst [vmem:[%s168] sm:$0xff] %v497
        %499 = vst [vmem:[%s175] sm:$0xff] %v495
        %s500 = sand.u32 %s72, 1
        %s501 = scalar_lea.sflag [#allocation6], %s500
        %s502 = sand.u32 %s72, 1
        %s503 = smul.addr %s502, 8
        %s504 = scalar_lea.vmem [#allocation5], %s503
        %s505 = sand.u32 %s100, 1
        %s506 = scalar_lea.sflag [#allocation8], %s505
        %s507 = sand.u32 %s100, 1
        %s508 = smul.addr %s507, 8
        %s509 = scalar_lea.vmem [#allocation7], %s508
        // Predicated region
        $region29: #{tpu_custom_call.1} parent=23 // pred_check
          %p510 = pneg %p82
        $region30: #{tpu_custom_call.1} parent=23 // pred_check_branch
          %512 = sbr.rel (%p510) target = $region32
        $region31: #{tpu_custom_call.1} parent=23 // pred_region
          %s514 = ssub.s32 128, 128
          %515 = vsyncadd %s501, %s514
          %s516 = smul.addr %s26, 2
          %s517 = sadd.s32 %s27, %s516
          %s518 = smul.addr %s517, 128
          %s519 = scalar_lea.hbm %s2, %s518
          %s521 = sshll.u32 %s504, 4
          %s522 = int_to_ptr.vmem [resolvable:$true] %s521
          %524 = dma.vmem_to_hbm [thread:$0]  %s522, 128, %s519, %s501
        $region32: #{tpu_custom_call.1} parent=23 // pred_fallthru
          _
        // Predicated region
        $region33: #{tpu_custom_call.1} parent=23 // pred_check
          %p525 = pneg %p110
        $region34: #{tpu_custom_call.1} parent=23 // pred_check_branch
          %527 = sbr.rel (%p525) target = $region36
        $region35: #{tpu_custom_call.1} parent=23 // pred_region
          %s529 = ssub.s32 128, 128
          %530 = vsyncadd %s506, %s529
          %s531 = smul.addr %s26, 2
          %s532 = sadd.s32 %s27, %s531
          %s533 = smul.addr %s532, 128
          %s534 = scalar_lea.hbm %s3, %s533
          %s536 = sshll.u32 %s509, 4
          %s537 = int_to_ptr.vmem [resolvable:$true] %s536
          %539 = dma.vmem_to_hbm [thread:$0]  %s537, 128, %s534, %s506
        $region36: #{tpu_custom_call.1} parent=23 // pred_fallthru
          _
      $region24: #{tpu_custom_call.1} parent=5 // pred_fallthru
        _
      %p540 = scmp.le.s32.totalorder 2, %s17
      // Predicated region
      $region37: #{tpu_custom_call.1} parent=5 // pred_check
        %p541 = pneg %p540
      $region38: #{tpu_custom_call.1} parent=5 // pred_check_branch
        %543 = sbr.rel (%p541) target = $region40
      $region39: #{tpu_custom_call.1} parent=5 // pred_region
        %s544 = ssub.s32 %s17, 2
        // Predicated region
        $region41: #{tpu_custom_call.1} parent=39 // pred_check
          %p545 = pneg %p88
        $region42: #{tpu_custom_call.1} parent=39 // pred_check_branch
          %547 = sbr.rel (%p545) target = $region44
        $region43: #{tpu_custom_call.1} parent=39 // pred_region
          %s548 = sand.u32 %s73, 1
          %s549 = scalar_lea.sflag [#allocation6], %s548
          %s550 = sand.u32 %s73, 1
          %s551 = smul.addr %s550, 8
          %s552 = scalar_lea.vmem [#allocation5], %s551
          %553 = dma.done %s549, 128
        $region44: #{tpu_custom_call.1} parent=39 // pred_fallthru
          _
        // Predicated region
        $region45: #{tpu_custom_call.1} parent=39 // pred_check
          %p554 = pneg %p116
        $region46: #{tpu_custom_call.1} parent=39 // pred_check_branch
          %556 = sbr.rel (%p554) target = $region48
        $region47: #{tpu_custom_call.1} parent=39 // pred_region
          %s557 = sand.u32 %s101, 1
          %s558 = scalar_lea.sflag [#allocation8], %s557
          %s559 = sand.u32 %s101, 1
          %s560 = smul.addr %s559, 8
          %s561 = scalar_lea.vmem [#allocation7], %s560
          %562 = dma.done %s558, 128
        $region48: #{tpu_custom_call.1} parent=39 // pred_fallthru
          _
      $region40: #{tpu_custom_call.1} parent=5 // pred_fallthru
        _
    $region6: #{tpu_custom_call.1} parent=1 // loop_footer
      %s21 = sadd.s32 1, %s17
    $region7: #{tpu_custom_call.1} parent=1 // loop_footer_branch
      %16 = sbr.rel target = $region3
    $region8: #{tpu_custom_call.1} parent=1 // loop_exit
      _
    %563 = vsyncpa [#allocation6], 1
    %s564 = scalar_lea.sflag [#allocation6], 1
    %565 = vsyncpa %s564, 1
    %566 = vsyncpa [#allocation8], 1
    %s567 = scalar_lea.sflag [#allocation8], 1
    %568 = vsyncpa %s567, 1

</llo_original>
